<compile_context>
chip_gen: v7x
topology: tpu7x:2x2x1
jax: 0.10.0
libtpu: 0.0.40
codegen_flags: <defaults>
</compile_context>

<pallas_src>
import math

import jax
import jax.numpy as jnp
from jax.experimental import pallas as pl
from jax.experimental.pallas import tpu as pltpu


def _pos_encoding_kernel(x_ref, pe_ref, o_ref):
    # x_ref: (Ts, B, D), pe_ref: (Ts, 1, D) -> broadcast add over the batch (sublane) dim.
    o_ref[...] = x_ref[...] + pe_ref[...]


def make_sinusoidal_pe(max_len, d_model, dtype=jnp.float32):
    """Replicates the PyTorch buffer: pe[pos, 2i] = sin, pe[pos, 2i+1] = cos.

    Returns shape (max_len, 1, d_model) in the compute dtype (built once at init).
    """
    assert d_model % 2 == 0, "d_model must be even for the sin/cos interleave"
    position = jnp.arange(max_len, dtype=jnp.float32)[:, None]                   # (L, 1)
    div_term = jnp.exp(jnp.arange(0, d_model, 2, dtype=jnp.float32)
                       * (-math.log(10000.0) / d_model))                         # (D//2,)
    angles = position * div_term                                                 # (L, D//2)
    pe = jnp.zeros((max_len, d_model), jnp.float32)
    pe = pe.at[:, 0::2].set(jnp.sin(angles))
    pe = pe.at[:, 1::2].set(jnp.cos(angles))
    return pe[:, None, :].astype(dtype)                                          # (L, 1, D)


def _sublane_multiple(dtype):
    # Second-minor (sublane) padding quantum per dtype: f32 -> 8, bf16 -> 16, int8/fp8 -> 32.
    return {4: 8, 2: 16, 1: 32}.get(jnp.dtype(dtype).itemsize, 8)


def _round_up(x, m):
    return ((x + m - 1) // m) * m


def positional_encoding_forward(x, pe_table, *, block_s=None):
    """x: (S, B, D).  pe_table: (max_len, 1, D), same dtype as x.  Returns x + pe[:S]."""
    S, B, D = x.shape
    max_len = pe_table.shape[0]
    if S > max_len:
        raise ValueError(f"sequence length {S} exceeds positional table max_len {max_len}")
    if pe_table.dtype != x.dtype:
        # Normally done once at init; kept as a safety net.
        pe_table = pe_table.astype(x.dtype)

    itemsize = jnp.dtype(x.dtype).itemsize
    sub = _sublane_multiple(x.dtype)
    b_pad = _round_up(B, sub)        # sublane-padded batch
    d_pad = _round_up(D, 128)        # lane-padded embed dim

    # Padded VMEM bytes per unit of block_s: x block + out block + pe block.
    bytes_per_s_row = (2 * b_pad + sub) * d_pad * itemsize

    # Generation-aware VMEM budget (v5e/v6e: 128 MiB, v7x: 64 MiB per TC).
    try:
        vmem_cap = int(pltpu.get_tpu_info().vmem_capacity_bytes)
    except Exception:  # pragma: no cover - conservative fallback
        vmem_cap = 64 * 1024 * 1024
    # Target per buffer SET; Pallas double-buffers every BlockSpec (factor 2 below).
    per_set_budget = max(2 * 1024 * 1024, min(vmem_cap // 8, 8 * 1024 * 1024))

    if block_s is None:
        block_s = per_set_budget // (2 * bytes_per_s_row)   # 2x: double buffering
        block_s = max(1, min(S, block_s))
        if S >= 2:
            # Guarantee >= 2 grid steps so the "parallel" axis can shard across
            # both v7x TensorCores (no-op on single-TC v5e/v6e).
            block_s = min(block_s, pl.cdiv(S, 2))
    grid = (pl.cdiv(S, block_s),)

    tile_bytes = bytes_per_s_row * block_s
    vmem_limit_bytes = int(min(vmem_cap, max(32 * 1024 * 1024, 4 * tile_bytes)))

    out = pl.pallas_call(
        _pos_encoding_kernel,
        out_shape=jax.ShapeDtypeStruct((S, B, D), x.dtype),
        grid_spec=pltpu.PrefetchScalarGridSpec(
            num_scalar_prefetch=0,
            grid=grid,
            in_specs=[pl.BlockSpec((block_s, B, D), lambda s: (s, 0, 0)),
                      pl.BlockSpec((block_s, 1, D), lambda s: (s, 0, 0))],
            out_specs=pl.BlockSpec((block_s, B, D), lambda s: (s, 0, 0)),
        ),
        input_output_aliases={0: 0},   # donate x: elementwise, in-place safe
        compiler_params=pltpu.CompilerParams(
            dimension_semantics=("parallel",),
            vmem_limit_bytes=vmem_limit_bytes),
        cost_estimate=pl.CostEstimate(
            flops=S * B * D,
            transcendentals=0,
            bytes_accessed=(2 * S * B * D + S * D) * itemsize),
    )(x, pe_table)

    # TODO(synk): dropout is identity at inference; training-mode mask not applied.
    return out


def _reference(x, pe_table):
    S = x.shape[0]
    return x + pe_table[:S].astype(x.dtype)


if __name__ == "__main__":
    S, B, D = 8, 2, 32          # seq len, batch, embed dim (d_model)
    MAX_LEN = 5000              # module default

    key = jax.random.PRNGKey(0)
    x = jax.random.normal(key, (S, B, D), dtype=jnp.float32)
    pe_table = make_sinusoidal_pe(MAX_LEN, D, dtype=x.dtype)   # built once at "init"

    out = jax.jit(positional_encoding_forward)(x, pe_table)
    jax.block_until_ready(out)

    ref = _reference(x, pe_table)
    assert out.shape == (S, B, D)
    assert jnp.allclose(out, ref, rtol=1e-6, atol=1e-6)

    print("KERNEL_OK")
</pallas_src>

<mosaic_0001>
module attributes {stable_mosaic.version = 11 : i64} {
  func.func @_pos_encoding_kernel(%arg0: i32, %arg1: memref<4x2x32xf32, #tpu.memory_space<vmem>>, %arg2: memref<4x1x32xf32, #tpu.memory_space<vmem>>, %arg3: memref<4x2x32xf32, #tpu.memory_space<vmem>>) attributes {dimension_semantics = [#tpu.dimension_semantics<parallel>], iteration_bounds = array<i64: 2>, scalar_prefetch = 0 : i64, scratch_operands = 0 : i64, tpu.core_type = #tpu.core_type<tc>, window_params = [{transform_indices = @transform_0, window_bounds = array<i64: 4, 2, 32>}, {transform_indices = @transform_1, window_bounds = array<i64: 4, 1, 32>}, {transform_indices = @transform_2, window_bounds = array<i64: 4, 2, 32>}]} {
    %c0 = arith.constant 0 : index
    %c0_0 = arith.constant 0 : index
    %c0_1 = arith.constant 0 : index
    %0 = vector.load %arg1[%c0, %c0_0, %c0_1] : memref<4x2x32xf32, #tpu.memory_space<vmem>>, vector<4x2x32xf32>
    %c0_2 = arith.constant 0 : index
    %c0_3 = arith.constant 0 : index
    %c0_4 = arith.constant 0 : index
    %1 = vector.load %arg2[%c0_2, %c0_3, %c0_4] : memref<4x1x32xf32, #tpu.memory_space<vmem>>, vector<4x1x32xf32>
    %2 = vector.broadcast %1 : vector<4x1x32xf32> to vector<4x2x32xf32>
    %3 = arith.addf %0, %2 : vector<4x2x32xf32>
    %c0_5 = arith.constant 0 : index
    %c0_6 = arith.constant 0 : index
    %c0_7 = arith.constant 0 : index
    %4 = vector.load %arg3[%c0_5, %c0_6, %c0_7] : memref<4x2x32xf32, #tpu.memory_space<vmem>>, vector<4x2x32xf32>
    tpu.vector_store %arg3[%c0_5, %c0_6, %c0_7], %3 {strides = array<i32>} : memref<4x2x32xf32, #tpu.memory_space<vmem>>, vector<4x2x32xf32>,
    return
  }
  func.func @transform_0(%arg0: i32) -> (i32, i32, i32) {
    %c0_i32 = arith.constant 0 : i32
    %c0_i32_0 = arith.constant 0 : i32
    %c0_i32_1 = arith.constant 0 : i32
    return %arg0, %c0_i32, %c0_i32_0 : i32, i32, i32
  }
  func.func @transform_1(%arg0: i32) -> (i32, i32, i32) {
    %c0_i32 = arith.constant 0 : i32
    %c0_i32_0 = arith.constant 0 : i32
    %c0_i32_1 = arith.constant 0 : i32
    return %arg0, %c0_i32, %c0_i32_0 : i32, i32, i32
  }
  func.func @transform_2(%arg0: i32) -> (i32, i32, i32) {
    %c0_i32 = arith.constant 0 : i32
    %c0_i32_0 = arith.constant 0 : i32
    %c0_i32_1 = arith.constant 0 : i32
    return %arg0, %c0_i32, %c0_i32_0 : i32, i32, i32
  }
}

</mosaic_0001>

<llo_original>
// kernel: positional_encoding_forward.1
$region0: #{positional_encoding_forward.1}
  #allocation0 [shape = 'u32[]', space=smem, size = 0x4, offset = 0x4, fixed_abs, tag = 'smem constant byte address 0x4 - core index']
  #allocation1 [shape = 'u32[144,128]{1,0:T(1,128)}', space=vmem, size = 0x12000, scoped, tag = 'internal scratch']
  %s0 = inlined_call_operand.hbm [shape: f32[8,2,32], index: 0, kind: input, shape index: {}, may-alias: {0,2}]
  %s1 = inlined_call_operand.vmem [shape: f32[5000,1,32], index: 1, kind: input, shape index: {}]
  %s2 = inlined_call_operand.hbm [shape: f32[8,2,32], index: 2, kind: output, shape index: {}, may-alias: {0,2}]
  %s3 = sld [smem:[#allocation0]]
  $region45: #{positional_encoding_forward.1} parent=0
    _
  %s5 = ssub.s32 1, %s3
  %s6 = scalar_select 0, %s5, %s3
  $region1: #{positional_encoding_forward.1} parent=0
    #allocation2 [shape = 'u8[8192]{0}', space=vmem, size = 0x2000, scoped, tag = 'input window, operand 0']
    #allocation3 [shape = 's32[2]{0}', space=sflag, size = 0x8, scoped, tag = 'scoped memory for positional_encoding_forward.1']
    #allocation4 [shape = 's32[2]{0}', space=sflag, size = 0x8, scoped, tag = 'scoped memory for positional_encoding_forward.1']
    #allocation5 [shape = 'u8[8192]{0}', space=vmem, size = 0x2000, scoped, tag = 'output window, operand 0']
    %7 = vsyncpa [#allocation3], 0
    %s8 = scalar_lea.sflag [#allocation3], 1
    %9 = vsyncpa %s8, 0
    %10 = vsyncpa [#allocation4], 0
    %s11 = scalar_lea.sflag [#allocation4], 1
    %12 = vsyncpa %s11, 0
    loop: start=0, step=1, limit=4
    $region2: #{positional_encoding_forward.1} parent=1 // loop_pre_header
      _
    $region3: #{positional_encoding_forward.1} parent=1 // loop_header
      %s14 = sphi 0, %s18
      %p15 = scmp.ge.s32.totalorder %s14, 4
      %s24 = sphi 0, %s26
      %s27 = sphi 0, %s24
      %s28 = sphi 0, %s27
      %s44 = sphi 0, %s28
      %s50 = sphi 0, %s52
      %s53 = sphi 0, %s50
      %s54 = sphi 0, %s53
      %s70 = sphi 0, %s54
      %s76 = sphi 0, %s78
      %s79 = sphi 0, %s76
      %s80 = sphi 0, %s79
      %s96 = sphi 0, %s80
    $region4: #{positional_encoding_forward.1} parent=1 // loop_header_branch
      %17 = sbr.rel (%p15) target = $region8
    $region5: #{positional_encoding_forward.1} parent=1 // loop_body
      %s19 = ssub.s32 %s14, 1
      %s20 = ssub.s32 %s14, 2
      %s21 = sadd.s32 %s14, 1
      %s22 = ssub.s32 %s14, %s21
      %p23 = scmp.eq.s32.totalorder %s22, 0
      %s25 = sadd.s32 %s24, 1
      %s26 = scalar_select %p23, %s24, %s25
      %p29 = pneg %p23
      %p30 = scmp.eq.s32.totalorder %s14, 1
      %p31 = por %p29, %p30
      %p32 = scmp.ne.s32.totalorder %s24, %s27
      %p33 = scmp.eq.s32.totalorder %s14, 0
      %p34 = por %p32, %p33
      %p35 = scmp.ne.s32.totalorder %s24, %s27
      %p36 = scmp.eq.s32.totalorder %s19, 1
      %p37 = por %p35, %p36
      %p38 = scmp.ne.s32.totalorder %s27, %s28
      %p39 = scmp.eq.s32.totalorder %s19, 0
      %p40 = por %p38, %p39
      %p41 = scmp.ne.s32.totalorder %s27, %s28
      %p42 = scmp.eq.s32.totalorder %s20, 1
      %p43 = por %p41, %p42
      %p45 = scmp.ne.s32.totalorder %s28, %s44
      %p46 = scmp.eq.s32.totalorder %s20, 0
      %p47 = por %p45, %p46
      %s48 = ssub.s32 %s14, %s21
      %p49 = scmp.eq.s32.totalorder %s48, 0
      %s51 = sadd.s32 %s50, 1
      %s52 = scalar_select %p49, %s50, %s51
      %p55 = pneg %p49
      %p56 = scmp.eq.s32.totalorder %s14, 1
      %p57 = por %p55, %p56
      %p58 = scmp.ne.s32.totalorder %s50, %s53
      %p59 = scmp.eq.s32.totalorder %s14, 0
      %p60 = por %p58, %p59
      %p61 = scmp.ne.s32.totalorder %s50, %s53
      %p62 = scmp.eq.s32.totalorder %s19, 1
      %p63 = por %p61, %p62
      %p64 = scmp.ne.s32.totalorder %s53, %s54
      %p65 = scmp.eq.s32.totalorder %s19, 0
      %p66 = por %p64, %p65
      %p67 = scmp.ne.s32.totalorder %s53, %s54
      %p68 = scmp.eq.s32.totalorder %s20, 1
      %p69 = por %p67, %p68
      %p71 = scmp.ne.s32.totalorder %s54, %s70
      %p72 = scmp.eq.s32.totalorder %s20, 0
      %p73 = por %p71, %p72
      %s74 = ssub.s32 %s14, %s21
      %p75 = scmp.eq.s32.totalorder %s74, 0
      %s77 = sadd.s32 %s76, 1
      %s78 = scalar_select %p75, %s76, %s77
      %p81 = pneg %p75
      %p82 = scmp.eq.s32.totalorder %s14, 1
      %p83 = por %p81, %p82
      %p84 = scmp.ne.s32.totalorder %s76, %s79
      %p85 = scmp.eq.s32.totalorder %s14, 0
      %p86 = por %p84, %p85
      %p87 = scmp.ne.s32.totalorder %s76, %s79
      %p88 = scmp.eq.s32.totalorder %s19, 1
      %p89 = por %p87, %p88
      %p90 = scmp.ne.s32.totalorder %s79, %s80
      %p91 = scmp.eq.s32.totalorder %s19, 0
      %p92 = por %p90, %p91
      %p93 = scmp.ne.s32.totalorder %s79, %s80
      %p94 = scmp.eq.s32.totalorder %s20, 1
      %p95 = por %p93, %p94
      %p97 = scmp.ne.s32.totalorder %s80, %s96
      %p98 = scmp.eq.s32.totalorder %s20, 0
      %p99 = por %p97, %p98
      %p100 = scmp.le.s32.totalorder 1, %s14
      %p101 = scmp.lt.s32.totalorder %s14, 3
      %p102 = pnand %p100, %p101
      %p103 = pneg %p102
      // Predicated region
      $region9: #{positional_encoding_forward.1} parent=5 // pred_check
        _
      $region10: #{positional_encoding_forward.1} parent=5 // pred_check_branch
        %105 = sbr.rel (%p102) target = $region12
      $region11: #{positional_encoding_forward.1} parent=5 // pred_region
        %s106 = ssub.s32 %s14, 1
      $region12: #{positional_encoding_forward.1} parent=5 // pred_fallthru
        _
      %p107 = scmp.lt.s32.totalorder %s14, 2
      // Predicated region
      $region13: #{positional_encoding_forward.1} parent=5 // pred_check
        %p108 = pneg %p107
      $region14: #{positional_encoding_forward.1} parent=5 // pred_check_branch
        %110 = sbr.rel (%p108) target = $region16
      $region15: #{positional_encoding_forward.1} parent=5 // pred_region
        // Predicated region
        $region17: #{positional_encoding_forward.1} parent=15 // pred_check
          %p111 = pneg %p34
        $region18: #{positional_encoding_forward.1} parent=15 // pred_check_branch
          %113 = sbr.rel (%p111) target = $region20
        $region19: #{positional_encoding_forward.1} parent=15 // pred_region
          %s114 = sand.u32 %s24, 1
          %s115 = scalar_lea.sflag [#allocation3], %s114
          %s116 = sand.u32 %s24, 1
          %s117 = smul.addr %s116, 8
          %s118 = scalar_lea.vmem [#allocation2], %s117
          %s119 = smul.u32 4, %s14
          %s121 = ssub.s32 128, 128
          %122 = vsyncadd %s115, %s121
          %s123 = smul.addr %s119, 32
          %s124 = scalar_lea.hbm %s0, %s123
          %s125 = sshll.u32 %s118, 4
          %s126 = int_to_ptr.vmem [resolvable:$true] %s125
          %131 = dma.hbm_to_vmem [thread:$0]  %s124, 128, %s126, %s115, 32, 32, 2
        $region20: #{positional_encoding_forward.1} parent=15 // pred_fallthru
          _
        // Predicated region
        $region21: #{positional_encoding_forward.1} parent=15 // pred_check
          %p132 = pneg %p60
        $region22: #{positional_encoding_forward.1} parent=15 // pred_check_branch
          %134 = sbr.rel (%p132) target = $region24
        $region23: #{positional_encoding_forward.1} parent=15 // pred_region
          %s135 = smul.u32 4, %s14
          %p136 = scmp.lt.s32.totalorder %s135, 4999
          %s137 = scalar_select %p136, %s135, 4999
          %s138 = scalar_lea.vmem %s1, %s137
          %s139 = smul.u32 4, %s14
        $region24: #{positional_encoding_forward.1} parent=15 // pred_fallthru
          _
      $region16: #{positional_encoding_forward.1} parent=5 // pred_fallthru
        _
      %p140 = scmp.le.s32.totalorder 1, %s14
      %p141 = scmp.lt.s32.totalorder %s14, 3
      %p142 = pnand %p140, %p141
      %p143 = pneg %p142
      // Predicated region
      $region25: #{positional_encoding_forward.1} parent=5 // pred_check
        _
      $region26: #{positional_encoding_forward.1} parent=5 // pred_check_branch
        %145 = sbr.rel (%p142) target = $region28
      $region27: #{positional_encoding_forward.1} parent=5 // pred_region
        %s146 = ssub.s32 %s14, 1
        %s147 = sand.u32 %s27, 1
        %s148 = scalar_lea.sflag [#allocation3], %s147
        %s149 = sand.u32 %s27, 1
        %s150 = smul.addr %s149, 8
        %s151 = scalar_lea.vmem [#allocation2], %s150
        // Predicated region
        $region29: #{positional_encoding_forward.1} parent=27 // pred_check
          %p152 = pneg %p40
        $region30: #{positional_encoding_forward.1} parent=27 // pred_check_branch
          %154 = sbr.rel (%p152) target = $region32
        $region31: #{positional_encoding_forward.1} parent=27 // pred_region
          %155 = dma.done %s148, 128
        $region32: #{positional_encoding_forward.1} parent=27 // pred_fallthru
          _
        %s156 = sand.u32 %s27, 1
        %s157 = scalar_lea.sflag [#allocation3], %s156
        %s158 = sand.u32 %s27, 1
        %s159 = smul.addr %s158, 8
        %s160 = scalar_lea.vmem [#allocation2], %s159
        %p161 = pneg %p40
        %p162 = pneg %p37
        %s163 = smul.u32 4, %s19
        %p164 = scmp.lt.s32.totalorder %s163, 4999
        %s165 = scalar_select %p164, %s163, 4999
        %s166 = scalar_lea.vmem %s1, %s165
        %p167 = pneg %p66
        %p168 = pneg %p63
        %p169 = pneg %p92
        %p170 = pneg %p89
        %s171 = sand.u32 %s79, 1
        %s172 = scalar_lea.sflag [#allocation4], %s171
        %s173 = sand.u32 %s79, 1
        %s174 = smul.addr %s173, 8
        %s175 = scalar_lea.vmem [#allocation5], %s174
        %s176 = smul.u32 4, %s19
        %s177 = smul.u32 4, %s19
        %p178 = scmp.lt.s32.totalorder %s177, 4999
        %s179 = scalar_select %p178, %s177, 4999
        %s180 = scalar_lea.vmem %s1, %s179
        %s181 = smul.u32 4, %s19
        %s182 = smul.u32 4, %s19
        %v183 = vld [vmem:[%s151] sm:$0x3]
        %v184 = vld [vmem:[%s151 + $0x2] sm:$0x3]
        %v185 = vld [vmem:[%s151 + $0x4] sm:$0x3]
        %v186 = vld [vmem:[%s151 + $0x6] sm:$0x3]
        %v187 = vld [vmem:[%s180] sm:$0x1]
        %v188 = vld [vmem:[%s180 + $0x1] sm:$0x1]
        %v189 = vld [vmem:[%s180 + $0x2] sm:$0x1]
        %v190 = vld [vmem:[%s180 + $0x3] sm:$0x1]
        %v195 = vlaneseq
        %v196 = vshrl.u32 %v195, 7
        %v197 = vsub.s32 0, %v196
        %v198 = vrot.slane %v187, %v197
        %v199 = vlaneseq
        %v200 = vshrl.u32 %v199, 7
        %v201 = vsub.s32 0, %v200
        %v202 = vrot.slane %v188, %v201
        %v203 = vlaneseq
        %v204 = vshrl.u32 %v203, 7
        %v205 = vsub.s32 0, %v204
        %v206 = vrot.slane %v189, %v205
        %v207 = vlaneseq
        %v208 = vshrl.u32 %v207, 7
        %v209 = vsub.s32 0, %v208
        %v210 = vrot.slane %v190, %v209
        %v215 = vadd.f32 %v183, %v198
        %v216 = vadd.f32 %v184, %v202
        %v217 = vadd.f32 %v185, %v206
        %v218 = vadd.f32 %v186, %v210
        %vm219 = vcmask 254976
        %220 = vst.msk [vmem:[%s175] sm:$0x3] %vm219, %v215
        %221 = vst.msk [vmem:[%s175 + $0x2] sm:$0x3] %vm219, %v216
        %222 = vst.msk [vmem:[%s175 + $0x4] sm:$0x3] %vm219, %v217
        %223 = vst.msk [vmem:[%s175 + $0x6] sm:$0x3] %vm219, %v218
        %s224 = sand.u32 %s79, 1
        %s225 = scalar_lea.sflag [#allocation4], %s224
        %s226 = sand.u32 %s79, 1
        %s227 = smul.addr %s226, 8
        %s228 = scalar_lea.vmem [#allocation5], %s227
        // Predicated region
        $region33: #{positional_encoding_forward.1} parent=27 // pred_check
          %p229 = pneg %p89
        $region34: #{positional_encoding_forward.1} parent=27 // pred_check_branch
          %231 = sbr.rel (%p229) target = $region36
        $region35: #{positional_encoding_forward.1} parent=27 // pred_region
          %s232 = smul.u32 4, %s19
          %s234 = ssub.s32 128, 128
          %235 = vsyncadd %s225, %s234
          %s236 = smul.addr %s232, 32
          %s237 = scalar_lea.hbm %s2, %s236
          %s238 = sshll.u32 %s228, 4
          %s239 = int_to_ptr.vmem [resolvable:$true] %s238
          %244 = dma.vmem_to_hbm [thread:$0]  %s239, 128, %s237, %s225, 32, 32, 2
        $region36: #{positional_encoding_forward.1} parent=27 // pred_fallthru
          _
      $region28: #{positional_encoding_forward.1} parent=5 // pred_fallthru
        _
      %p245 = scmp.le.s32.totalorder 2, %s14
      // Predicated region
      $region37: #{positional_encoding_forward.1} parent=5 // pred_check
        %p246 = pneg %p245
      $region38: #{positional_encoding_forward.1} parent=5 // pred_check_branch
        %248 = sbr.rel (%p246) target = $region40
      $region39: #{positional_encoding_forward.1} parent=5 // pred_region
        %s249 = ssub.s32 %s14, 2
        // Predicated region
        $region41: #{positional_encoding_forward.1} parent=39 // pred_check
          %p250 = pneg %p95
        $region42: #{positional_encoding_forward.1} parent=39 // pred_check_branch
          %252 = sbr.rel (%p250) target = $region44
        $region43: #{positional_encoding_forward.1} parent=39 // pred_region
          %s253 = sand.u32 %s80, 1
          %s254 = scalar_lea.sflag [#allocation4], %s253
          %s255 = sand.u32 %s80, 1
          %s256 = smul.addr %s255, 8
          %s257 = scalar_lea.vmem [#allocation5], %s256
          %258 = dma.done %s254, 128
        $region44: #{positional_encoding_forward.1} parent=39 // pred_fallthru
          _
      $region40: #{positional_encoding_forward.1} parent=5 // pred_fallthru
        _
    $region6: #{positional_encoding_forward.1} parent=1 // loop_footer
      %s18 = sadd.s32 1, %s14
    $region7: #{positional_encoding_forward.1} parent=1 // loop_footer_branch
      %13 = sbr.rel target = $region3
    $region8: #{positional_encoding_forward.1} parent=1 // loop_exit
      _
    %259 = vsyncpa [#allocation3], 1
    %s260 = scalar_lea.sflag [#allocation3], 1
    %261 = vsyncpa %s260, 1
    %262 = vsyncpa [#allocation4], 1
    %s263 = scalar_lea.sflag [#allocation4], 1
    %264 = vsyncpa %s263, 1

</llo_original>
